<compile_context>
chip_gen: v6e
topology: v6e:2x2x1
jax: 0.10.0
libtpu: 0.0.40
codegen_flags: <defaults>
</compile_context>

<pallas_src>
import jax
import jax.numpy as jnp
from jax.experimental import pallas as pl
from jax.experimental.pallas import tpu as pltpu

TEMPERATURE = 0.05
EPS = 1e-8
_INV_TEMP = 1.0 / TEMPERATURE
_INV_EPS = 1.0 / EPS

_VMEM_LIMIT_BYTES = 32 * 1024 * 1024        # explicit scoped-VMEM limit (all gens)
_RESIDENT_BUDGET_BYTES = 20 * 1024 * 1024   # conservative: fits v7x (64 MiB phys)


# --------------------------------------------------------------------------
# Pre-pass: normalize rows (clamp at eps), fold 1/temperature into x0, cast to
# the streaming dtype, and emit the diagonal of the sim matrix.
# --------------------------------------------------------------------------
def _prep_kernel(x0_ref, x1_ref, x0n_ref, x1n_ref, diag_ref):
    a = x0_ref[...].astype(jnp.float32)     # (T, Dp)
    b = x1_ref[...].astype(jnp.float32)     # (T, Dp)

    # 1/max(||v||, eps) == min(rsqrt(sum v^2), 1/eps); rsqrt+mul uses the EUP.
    inv_a = jnp.minimum(jax.lax.rsqrt(jnp.sum(a * a, axis=1, keepdims=True)),
                        _INV_EPS) * _INV_TEMP
    inv_b = jnp.minimum(jax.lax.rsqrt(jnp.sum(b * b, axis=1, keepdims=True)),
                        _INV_EPS)

    a_c = (a * inv_a).astype(x0n_ref.dtype)   # x0_norm / temperature (cast)
    b_c = (b * inv_b).astype(x1n_ref.dtype)   # x1_norm                (cast)
    x0n_ref[...] = a_c
    x1n_ref[...] = b_c

    # Diagonal from the *cast* values -> identical to what the MXU sees in the
    # main kernel (bf16 values are exactly representable in f32).
    diag_ref[...] = jnp.sum(a_c.astype(jnp.float32) * b_c.astype(jnp.float32),
                            axis=1, keepdims=True)


# --------------------------------------------------------------------------
# Main kernel: streaming logsumexp over column tiles of the sim matrix.
# --------------------------------------------------------------------------
def _lse_kernel(x0_ref, x1_ref, out_ref, m_sc, l_sc):
    j = pl.program_id(1)

    @pl.when(j == 0)
    def _init():
        m_sc[...] = jnp.full(m_sc.shape, -jnp.inf, jnp.float32)
        l_sc[...] = jnp.zeros(l_sc.shape, jnp.float32)

    # sim tile: contract last dims of both operands (no transpose pass).
    s = jax.lax.dot_general(
        x0_ref[...], x1_ref[...],
        dimension_numbers=(((1,), (1,)), ((), ())),
        preferred_element_type=jnp.float32)            # (T_row, T_col)

    # Online (streaming) logsumexp over the column-tile axis.
    m_prev = m_sc[...]
    m_new = jnp.maximum(m_prev, jnp.max(s, axis=1, keepdims=True))
    l_sc[...] = (jnp.exp(m_prev - m_new) * l_sc[...]
                 + jnp.sum(jnp.exp(s - m_new), axis=1, keepdims=True))
    m_sc[...] = m_new

    @pl.when(j == pl.num_programs(1) - 1)
    def _finalize():
        # NOTE: (T,1) output -> masked partial stores; traffic is tiny.
        out_ref[...] = m_sc[...] + jnp.log(l_sc[...])


# --------------------------------------------------------------------------
# Tile selection.
# --------------------------------------------------------------------------
def _pick_row_tile(B: int) -> int:
    # Large resident row tile (reduces the number of passes over x1).  For
    # B >= 512 cap at B//2 so the "parallel" row axis has >= 2 tiles and both
    # v7x TensorCores get work.
    cap = 512
    if B >= 512:
        cap = min(512, B // 2)
    if B <= cap:
        return B
    t = cap - (cap % 8)
    while t >= 8:
        if B % t == 0:
            return t
        t -= 8
    # TODO(synk): masked tail tiles for large B not divisible by 8; falls back
    # to a single full-height block (can exceed VMEM for very large B).
    return B


def _pick_col_tile(B: int) -> int:
    cap = 256
    if B <= cap:
        return B
    t = cap
    while t >= 8:
        if B % t == 0:
            return t
        t -= 8
    return B


# --------------------------------------------------------------------------
# Wrapper.
# --------------------------------------------------------------------------
def pair_loss(x0: jax.Array, x1: jax.Array, *,
              use_bf16_matmul: bool = True) -> jax.Array:
    """x0, x1: [B, D] arrays.  Returns scalar float32 loss.

    use_bf16_matmul (default True): stream normalized operands as bf16 and run
    the MXU in bf16 with f32 accumulation (native on v5e/v6e/v7x).  Set False
    for strict f32 parity with the PyTorch reference.  All normalization /
    exp / log math is f32 either way.
    """
    assert x0.shape == x1.shape and x0.ndim == 2
    B, D = x0.shape

    # Zero-pad D to a multiple of 128: lane-dense loads and full-width MXU
    # contraction; exactly norm- and dot-preserving.  (B is never padded — the
    # logsumexp / mean would need masking.)
    Dp = max(128, ((D + 127) // 128) * 128)
    if Dp != D:
        x0 = jnp.pad(x0, ((0, 0), (0, Dp - D)))
        x1 = jnp.pad(x1, ((0, 0), (0, Dp - D)))

    stream_dtype = jnp.bfloat16 if use_bf16_matmul else jnp.float32
    itemsize = 2 if use_bf16_matmul else 4

    T_row = _pick_row_tile(B)

    # --- pre-pass: normalize + cast + diagonal (one O(B*Dp) sweep) ---------
    x0n, x1n, diag = pl.pallas_call(
        _prep_kernel,
        out_shape=(jax.ShapeDtypeStruct((B, Dp), stream_dtype),
                   jax.ShapeDtypeStruct((B, Dp), stream_dtype),
                   jax.ShapeDtypeStruct((B, 1), jnp.float32)),
        grid_spec=pltpu.PrefetchScalarGridSpec(
            num_scalar_prefetch=0,
            grid=(B // T_row,),
            in_specs=[pl.BlockSpec((T_row, Dp), lambda i: (i, 0)),
                      pl.BlockSpec((T_row, Dp), lambda i: (i, 0))],
            out_specs=[pl.BlockSpec((T_row, Dp), lambda i: (i, 0)),
                       pl.BlockSpec((T_row, Dp), lambda i: (i, 0)),
                       pl.BlockSpec((T_row, 1), lambda i: (i, 0))],
        ),
        compiler_params=pltpu.CompilerParams(
            dimension_semantics=("parallel",),
            vmem_limit_bytes=_VMEM_LIMIT_BYTES),
    )(x0, x1)

    # --- main pass: streaming logsumexp over the sim matrix ----------------
    # Keep x1n fully VMEM-resident when it fits a conservative budget
    # (constant block index => fetched from HBM exactly once); otherwise
    # stream asymmetric (T_row x T_col) tiles.
    x1_cost = 2 * B * Dp * itemsize            # assume double-buffering
    row_cost = 2 * T_row * Dp * itemsize
    resident = (x1_cost + row_cost) <= _RESIDENT_BUDGET_BYTES
    T_col = B if resident else _pick_col_tile(B)
    nr, nc = B // T_row, B // T_col

    lse = pl.pallas_call(
        _lse_kernel,
        out_shape=jax.ShapeDtypeStruct((B, 1), jnp.float32),
        grid_spec=pltpu.PrefetchScalarGridSpec(
            num_scalar_prefetch=0,
            grid=(nr, nc),                               # col (reduction) last
            in_specs=[
                pl.BlockSpec((T_row, Dp), lambda i, j: (i, 0)),  # x0 row tile
                pl.BlockSpec((T_col, Dp), lambda i, j: (j, 0)),  # x1 col tile
            ],
            out_specs=pl.BlockSpec((T_row, 1), lambda i, j: (i, 0)),
            scratch_shapes=[
                pltpu.VMEM((T_row, 1), jnp.float32),   # running max
                pltpu.VMEM((T_row, 1), jnp.float32),   # running sum
            ],
        ),
        compiler_params=pltpu.CompilerParams(
            dimension_semantics=("parallel", "arbitrary"),
            vmem_limit_bytes=_VMEM_LIMIT_BYTES),
    )(x0n, x1n)

    # per-row loss_i = logsumexp_j sim[i, j] - sim[i, i]
    return jnp.mean(lse[:, 0] - diag[:, 0])


# --------------------------------------------------------------------------
# Pure-JAX reference for sanity checking.
# --------------------------------------------------------------------------
def _pair_loss_ref(x0, x1):
    a_n = jnp.linalg.norm(x0, axis=1, keepdims=True)
    b_n = jnp.linalg.norm(x1, axis=1, keepdims=True)
    a_norm = x0 / jnp.maximum(a_n, EPS)
    b_norm = x1 / jnp.maximum(b_n, EPS)
    sim = (a_norm @ b_norm.T) / TEMPERATURE
    lse = jax.scipy.special.logsumexp(sim, axis=1)
    diag = jnp.diagonal(sim)
    return jnp.mean(lse - diag)


if __name__ == "__main__":
    key = jax.random.PRNGKey(0)
    k0, k1 = jax.random.split(key)
    B, D = 8, 32
    x0 = jax.random.normal(k0, (B, D), dtype=jnp.float32)
    x1 = jax.random.normal(k1, (B, D), dtype=jnp.float32)

    ref = _pair_loss_ref(x0, x1)

    # f32 streaming path: strict parity with the reference.
    loss_f32 = pair_loss(x0, x1, use_bf16_matmul=False)
    jax.block_until_ready(loss_f32)
    assert jnp.allclose(loss_f32, ref, atol=1e-3, rtol=1e-3), (loss_f32, ref)

    # bf16 streaming path (default, perf mode): looser tolerance — logits span
    # ~±20 so bf16 rounding can move the loss by O(1e-1).
    loss_bf16 = pair_loss(x0, x1)
    jax.block_until_ready(loss_bf16)
    assert bool(jnp.isfinite(loss_bf16)), loss_bf16
    assert abs(float(loss_bf16) - float(ref)) < 0.5, (loss_bf16, ref)

    print("KERNEL_OK")
</pallas_src>

<mosaic_0001>
module attributes {stable_mosaic.version = 11 : i64} {
  func.func @_prep_kernel(%arg0: i32, %arg1: memref<8x128xf32, #tpu.memory_space<vmem>>, %arg2: memref<8x128xf32, #tpu.memory_space<vmem>>, %arg3: memref<8x128xf32, #tpu.memory_space<vmem>>, %arg4: memref<8x128xf32, #tpu.memory_space<vmem>>, %arg5: memref<8x1xf32, #tpu.memory_space<vmem>>) attributes {dimension_semantics = [#tpu.dimension_semantics<parallel>], iteration_bounds = array<i64: 1>, scalar_prefetch = 0 : i64, scratch_operands = 0 : i64, tpu.core_type = #tpu.core_type<tc>, window_params = [{transform_indices = @transform_0, window_bounds = array<i64: 8, 128>}, {transform_indices = @transform_1, window_bounds = array<i64: 8, 128>}, {transform_indices = @transform_2, window_bounds = array<i64: 8, 128>}, {transform_indices = @transform_3, window_bounds = array<i64: 8, 128>}, {transform_indices = @transform_4, window_bounds = array<i64: 8, 1>}]} {
    %c0 = arith.constant 0 : index
    %c0_0 = arith.constant 0 : index
    %0 = vector.load %arg1[%c0, %c0_0] : memref<8x128xf32, #tpu.memory_space<vmem>>, vector<8x128xf32>
    %c0_1 = arith.constant 0 : index
    %c0_2 = arith.constant 0 : index
    %1 = vector.load %arg2[%c0_1, %c0_2] : memref<8x128xf32, #tpu.memory_space<vmem>>, vector<8x128xf32>
    %2 = arith.mulf %0, %0 : vector<8x128xf32>
    %cst = arith.constant dense<0.000000e+00> : vector<8xf32>
    %3 = vector.multi_reduction <add>, %2, %cst [1] : vector<8x128xf32> to vector<8xf32>
    %4 = vector.shape_cast %3 : vector<8xf32> to vector<8x1xf32>
    %5 = math.rsqrt %4 : vector<8x1xf32>
    %cst_3 = arith.constant 1.000000e+08 : f32
    %6 = vector.broadcast %cst_3 : f32 to vector<8x1xf32>
    %7 = arith.minimumf %5, %6 : vector<8x1xf32>
    %cst_4 = arith.constant 2.000000e+01 : f32
    %8 = vector.broadcast %cst_4 : f32 to vector<8x1xf32>
    %9 = arith.mulf %7, %8 : vector<8x1xf32>
    %10 = arith.mulf %1, %1 : vector<8x128xf32>
    %cst_5 = arith.constant dense<0.000000e+00> : vector<8xf32>
    %11 = vector.multi_reduction <add>, %10, %cst_5 [1] : vector<8x128xf32> to vector<8xf32>
    %12 = vector.shape_cast %11 : vector<8xf32> to vector<8x1xf32>
    %13 = math.rsqrt %12 : vector<8x1xf32>
    %cst_6 = arith.constant 1.000000e+08 : f32
    %14 = vector.broadcast %cst_6 : f32 to vector<8x1xf32>
    %15 = arith.minimumf %13, %14 : vector<8x1xf32>
    %16 = vector.broadcast %9 : vector<8x1xf32> to vector<8x128xf32>
    %17 = arith.mulf %0, %16 : vector<8x128xf32>
    %18 = vector.broadcast %15 : vector<8x1xf32> to vector<8x128xf32>
    %19 = arith.mulf %1, %18 : vector<8x128xf32>
    %c0_7 = arith.constant 0 : index
    %c0_8 = arith.constant 0 : index
    %20 = vector.load %arg3[%c0_7, %c0_8] : memref<8x128xf32, #tpu.memory_space<vmem>>, vector<8x128xf32>
    tpu.vector_store %arg3[%c0_7, %c0_8], %17 {strides = array<i32>} : memref<8x128xf32, #tpu.memory_space<vmem>>, vector<8x128xf32>,
    %c0_9 = arith.constant 0 : index
    %c0_10 = arith.constant 0 : index
    %21 = vector.load %arg4[%c0_9, %c0_10] : memref<8x128xf32, #tpu.memory_space<vmem>>, vector<8x128xf32>
    tpu.vector_store %arg4[%c0_9, %c0_10], %19 {strides = array<i32>} : memref<8x128xf32, #tpu.memory_space<vmem>>, vector<8x128xf32>,
    %22 = arith.mulf %17, %19 : vector<8x128xf32>
    %cst_11 = arith.constant dense<0.000000e+00> : vector<8xf32>
    %23 = vector.multi_reduction <add>, %22, %cst_11 [1] : vector<8x128xf32> to vector<8xf32>
    %24 = vector.shape_cast %23 : vector<8xf32> to vector<8x1xf32>
    %c0_12 = arith.constant 0 : index
    %c0_13 = arith.constant 0 : index
    %25 = vector.load %arg5[%c0_12, %c0_13] : memref<8x1xf32, #tpu.memory_space<vmem>>, vector<8x1xf32>
    tpu.vector_store %arg5[%c0_12, %c0_13], %24 {strides = array<i32>} : memref<8x1xf32, #tpu.memory_space<vmem>>, vector<8x1xf32>,
    return
  }
  func.func @transform_0(%arg0: i32) -> (i32, i32) {
    %c0_i32 = arith.constant 0 : i32
    %c0_i32_0 = arith.constant 0 : i32
    return %arg0, %c0_i32 : i32, i32
  }
  func.func @transform_1(%arg0: i32) -> (i32, i32) {
    %c0_i32 = arith.constant 0 : i32
    %c0_i32_0 = arith.constant 0 : i32
    return %arg0, %c0_i32 : i32, i32
  }
  func.func @transform_2(%arg0: i32) -> (i32, i32) {
    %c0_i32 = arith.constant 0 : i32
    %c0_i32_0 = arith.constant 0 : i32
    return %arg0, %c0_i32 : i32, i32
  }
  func.func @transform_3(%arg0: i32) -> (i32, i32) {
    %c0_i32 = arith.constant 0 : i32
    %c0_i32_0 = arith.constant 0 : i32
    return %arg0, %c0_i32 : i32, i32
  }
  func.func @transform_4(%arg0: i32) -> (i32, i32) {
    %c0_i32 = arith.constant 0 : i32
    %c0_i32_0 = arith.constant 0 : i32
    return %arg0, %c0_i32 : i32, i32
  }
}

</mosaic_0001>

<llo_original>
// kernel: tpu_custom_call.1
$region0: #{tpu_custom_call.1}
  #allocation0 [shape = 'u32[]', space=smem, size = 0x4, offset = 0x4, fixed_abs, tag = 'smem constant byte address 0x4 - core index']
  #allocation1 [shape = 'u32[144,128]{1,0:T(1,128)}', space=vmem, size = 0x12000, scoped, tag = 'internal scratch']
  %s0 = inlined_call_operand.hbm [shape: f32[8,128], index: 0, kind: input, shape index: {}]
  %s1 = inlined_call_operand.hbm [shape: f32[8,128], index: 1, kind: input, shape index: {}]
  %s2 = inlined_call_operand.hbm [shape: f32[8,128], index: 2, kind: output, shape index: {0}]
  %s3 = inlined_call_operand.hbm [shape: f32[8,128], index: 3, kind: output, shape index: {1}]
  %s4 = inlined_call_operand.vmem [shape: f32[8,1], index: 4, kind: output, shape index: {2}]
  %5 = xla_tuple %s2, %s3, %s4
  %s6 = sld [smem:[#allocation0]]
  $region42: #{tpu_custom_call.1} parent=0
    _
  %s8 = ssub.s32 1, %s6
  %s9 = scalar_select 0, %s8, %s6
  $region1: #{tpu_custom_call.1} parent=0
    #allocation2 [shape = 'u8[4096]{0}', space=vmem, size = 0x1000, scoped, tag = 'input window, operand 0, single buffered']
    #allocation3 [shape = 's32[1]{0}', space=sflag, size = 0x4, scoped, tag = 'scoped memory for tpu_custom_call.1']
    #allocation4 [shape = 's32[1]{0}', space=sflag, size = 0x4, scoped, tag = 'scoped memory for tpu_custom_call.1']
    #allocation5 [shape = 'u8[4096]{0}', space=vmem, size = 0x1000, scoped, tag = 'input window, operand 1, single buffered']
    #allocation6 [shape = 's32[1]{0}', space=sflag, size = 0x4, scoped, tag = 'scoped memory for tpu_custom_call.1']
    #allocation7 [shape = 'u8[4096]{0}', space=vmem, size = 0x1000, scoped, tag = 'output window, operand 0, single buffered']
    #allocation8 [shape = 'u8[4096]{0}', space=vmem, size = 0x1000, scoped, tag = 'output window, operand 1, single buffered']
    #allocation9 [shape = 's32[1]{0}', space=sflag, size = 0x4, scoped, tag = 'scoped memory for tpu_custom_call.1']
    %10 = vsyncpa [#allocation3], 0
    %11 = vsyncpa [#allocation6], 0
    %12 = vsyncpa [#allocation4], 0
    %13 = vsyncpa [#allocation9], 0
    // Predicated region
    $region2: #{tpu_custom_call.1} parent=1 // pred_check
      _
    $region3: #{tpu_custom_call.1} parent=1 // pred_check_branch
      %15 = sbr.rel (0) target = $region5
    $region4: #{tpu_custom_call.1} parent=1 // pred_region
      %s17 = ssub.s32 128, 128
      %18 = vsyncadd [#allocation3], %s17
      %s20 = sshll.u32 [#allocation2], 4
      %s21 = int_to_ptr.vmem [resolvable:$true] %s20
      %23 = dma.hbm_to_vmem [thread:$0]  %s0, 128, %s21, [#allocation3]
    $region5: #{tpu_custom_call.1} parent=1 // pred_fallthru
      _
    // Predicated region
    $region6: #{tpu_custom_call.1} parent=1 // pred_check
      _
    $region7: #{tpu_custom_call.1} parent=1 // pred_check_branch
      %25 = sbr.rel (0) target = $region9
    $region8: #{tpu_custom_call.1} parent=1 // pred_region
      %s27 = ssub.s32 128, 128
      %28 = vsyncadd [#allocation6], %s27
      %s30 = sshll.u32 [#allocation5], 4
      %s31 = int_to_ptr.vmem [resolvable:$true] %s30
      %33 = dma.hbm_to_vmem [thread:$0]  %s1, 128, %s31, [#allocation6]
    $region9: #{tpu_custom_call.1} parent=1 // pred_fallthru
      _
    // Predicated region
    $region10: #{tpu_custom_call.1} parent=1 // pred_check
      _
    $region11: #{tpu_custom_call.1} parent=1 // pred_check_branch
      %35 = sbr.rel (0) target = $region13
    $region12: #{tpu_custom_call.1} parent=1 // pred_region
      %36 = dma.done [#allocation3], 128
    $region13: #{tpu_custom_call.1} parent=1 // pred_fallthru
      _
    // Predicated region
    $region14: #{tpu_custom_call.1} parent=1 // pred_check
      _
    $region15: #{tpu_custom_call.1} parent=1 // pred_check_branch
      %38 = sbr.rel (0) target = $region17
    $region16: #{tpu_custom_call.1} parent=1 // pred_region
      %39 = dma.done [#allocation6], 128
    $region17: #{tpu_custom_call.1} parent=1 // pred_fallthru
      _
    %v40 = vld [vmem:[#allocation2] sm:$0xff]
    %v41 = vld [vmem:[#allocation5] sm:$0xff]
    %v42 = vmul.f32 %v40, %v40
    %43 = vadd.xlane.f32.xlu0 %v42
    %v44 = vpop.xlane.xlu0 %43
    %v45 = vrsqrt.pop %v44
    %v46 = vmin.f32 %v45, 1e+08
    %v47 = vmul.f32 %v46, 20.0
    %v48 = vmul.f32 %v41, %v41
    %49 = vadd.xlane.f32.xlu0 %v48
    %v50 = vpop.xlane.xlu0 %49
    %v51 = vrsqrt.pop %v50
    %v52 = vmin.f32 %v51, 1e+08
    %v53 = vmul.f32 %v40, %v47
    %v54 = vmul.f32 %v41, %v52
    %55 = vst [vmem:[#allocation7] sm:$0xff] %v53
    %56 = vst [vmem:[#allocation8] sm:$0xff] %v54
    %v57 = vmul.f32 %v53, %v54
    %58 = vadd.xlane.f32.xlu0 %v57
    %v59 = vpop.xlane.xlu0 %58
    %vm60 = vcmask 7168
    %61 = vst.msk [vmem:[%s4] sm:$0xff] %vm60, %v59
    // Predicated region
    $region18: #{tpu_custom_call.1} parent=1 // pred_check
      _
    $region19: #{tpu_custom_call.1} parent=1 // pred_check_branch
      %63 = sbr.rel (0) target = $region21
    $region20: #{tpu_custom_call.1} parent=1 // pred_region
      %s65 = ssub.s32 128, 128
      %66 = vsyncadd [#allocation4], %s65
      %s68 = sshll.u32 [#allocation7], 4
      %s69 = int_to_ptr.vmem [resolvable:$true] %s68
      %71 = dma.vmem_to_hbm [thread:$0]  %s69, 128, %s2, [#allocation4]
    $region21: #{tpu_custom_call.1} parent=1 // pred_fallthru
      _
    // Predicated region
    $region22: #{tpu_custom_call.1} parent=1 // pred_check
      _
    $region23: #{tpu_custom_call.1} parent=1 // pred_check_branch
      %73 = sbr.rel (0) target = $region25
    $region24: #{tpu_custom_call.1} parent=1 // pred_region
      %s75 = ssub.s32 128, 128
      %76 = vsyncadd [#allocation9], %s75
      %s78 = sshll.u32 [#allocation8], 4
      %s79 = int_to_ptr.vmem [resolvable:$true] %s78
      %81 = dma.vmem_to_hbm [thread:$0]  %s79, 128, %s3, [#allocation9]
    $region25: #{tpu_custom_call.1} parent=1 // pred_fallthru
      _
    // Predicated region
    $region26: #{tpu_custom_call.1} parent=1 // pred_check
      _
    $region27: #{tpu_custom_call.1} parent=1 // pred_check_branch
      %83 = sbr.rel (0) target = $region29
    $region28: #{tpu_custom_call.1} parent=1 // pred_region
      _
    $region29: #{tpu_custom_call.1} parent=1 // pred_fallthru
      _
    // Predicated region
    $region30: #{tpu_custom_call.1} parent=1 // pred_check
      _
    $region31: #{tpu_custom_call.1} parent=1 // pred_check_branch
      %85 = sbr.rel (0) target = $region33
    $region32: #{tpu_custom_call.1} parent=1 // pred_region
      %86 = dma.done [#allocation4], 128
    $region33: #{tpu_custom_call.1} parent=1 // pred_fallthru
      _
    // Predicated region
    $region34: #{tpu_custom_call.1} parent=1 // pred_check
      _
    $region35: #{tpu_custom_call.1} parent=1 // pred_check_branch
      %88 = sbr.rel (0) target = $region37
    $region36: #{tpu_custom_call.1} parent=1 // pred_region
      %89 = dma.done [#allocation9], 128
    $region37: #{tpu_custom_call.1} parent=1 // pred_fallthru
      _
    // Predicated region
    $region38: #{tpu_custom_call.1} parent=1 // pred_check
      _
    $region39: #{tpu_custom_call.1} parent=1 // pred_check_branch
      %91 = sbr.rel (0) target = $region41
    $region40: #{tpu_custom_call.1} parent=1 // pred_region
      _
    $region41: #{tpu_custom_call.1} parent=1 // pred_fallthru
      _
    %92 = vsyncpa [#allocation3], 1
    %93 = vsyncpa [#allocation6], 1
    %94 = vsyncpa [#allocation4], 1
    %95 = vsyncpa [#allocation9], 1

</llo_original>
